<compile_context>
chip_gen: v7x
topology: tpu7x:2x2x1
jax: 0.10.0
libtpu: 0.0.40
codegen_flags: <defaults>
</compile_context>

<pallas_src>
from functools import partial

import jax
import jax.numpy as jnp
from jax.experimental import pallas as pl
from jax.experimental.pallas import tpu as pltpu


def _impala_residual_kernel(x_ref, w0_ref, b0_ref, w1_ref, b1_ref, m_ref,
                            o_ref, *, width):
    # x_ref : (1, C, H*W)  one batch element, channels-major, flat spatial
    # w*_ref: (C, 9*C)     rows = out channel, cols ordered (ky, kx, cin)
    # b*_ref: (C, 1)       biases (broadcast along lanes)
    # m_ref : (9, H*W)     per-tap 0/1 validity masks for the zero padding
    # o_ref : (1, C, H*W)
    hw = x_ref.shape[2]
    taps = [(dy, dx) for dy in (-1, 0, 1) for dx in (-1, 0, 1)]

    # Load the 8 off-center boundary masks once; reused by both convs.
    masks = [None if (dy == 0 and dx == 0) else m_ref[pl.ds(t, 1), :]
             for t, (dy, dx) in enumerate(taps)]

    def conv3x3(a, w_ref, b_ref):
        # im2col via lane rolls + boundary masks, then a single MXU matmul
        # with K = 9*C (instead of nine K=C matmuls).
        cols = []
        for t, (dy, dx) in enumerate(taps):
            s = dy * width + dx                      # flat-index tap offset
            if s == 0:
                cols.append(a)
            else:
                shifted = pltpu.roll(a, shift=(-s) % hw, axis=1)
                cols.append(shifted * masks[t])
        patches = jnp.concatenate(cols, axis=0)      # (9*C, H*W)
        return jnp.dot(w_ref[...], patches,
                       preferred_element_type=jnp.float32) + b_ref[...]

    a0 = jnp.maximum(x_ref[0].astype(jnp.float32), 0.0)   # relu(x)
    y0 = conv3x3(a0, w0_ref, b0_ref)                       # conv_0
    a1 = jnp.maximum(y0, 0.0)                              # relu
    y1 = conv3x3(a1, w1_ref, b1_ref)                       # conv_1
    # Residual: re-read x from its VMEM-resident ref (not kept live above).
    o_ref[0] = (x_ref[0] + y1).astype(o_ref.dtype)


def impala_cnn_residual(x_nchw, w0_oihw, b0, w1_oihw, b1):
    """x: (N, C, H, W) f32. w*: (C, C, 3, 3) OIHW (PyTorch layout). b*: (C,)."""
    N, C, H, W = x_nchw.shape
    HW = H * W
    x2 = x_nchw.reshape(N, C, HW)                   # free reshape; lanes = H*W

    def prep_w(w):                                  # (O,I,3,3) -> (O, 9*I), (ky,kx,ci) order
        return jnp.transpose(w, (0, 2, 3, 1)).reshape(C, 9 * C)

    w0m, w1m = prep_w(w0_oihw), prep_w(w1_oihw)
    b0c, b1c = b0.reshape(C, 1), b1.reshape(C, 1)

    # Per-tap validity masks for "same" zero padding (one-time, outside kernel).
    yy = jnp.arange(H).reshape(H, 1)
    xx = jnp.arange(W).reshape(1, W)
    masks = []
    for dy in (-1, 0, 1):
        for dx in (-1, 0, 1):
            valid = ((yy + dy >= 0) & (yy + dy < H) &
                     (xx + dx >= 0) & (xx + dx < W))
            masks.append(valid.reshape(HW))
    mask = jnp.stack(masks, axis=0).astype(x2.dtype)        # (9, HW)

    kernel = partial(_impala_residual_kernel, width=W)

    out = pl.pallas_call(
        kernel,
        out_shape=jax.ShapeDtypeStruct((N, C, HW), x2.dtype),
        grid_spec=pltpu.PrefetchScalarGridSpec(
            num_scalar_prefetch=0,
            grid=(N,),
            in_specs=[
                pl.BlockSpec((1, C, HW), lambda n: (n, 0, 0)),
                pl.BlockSpec((C, 9 * C), lambda n: (0, 0)),
                pl.BlockSpec((C, 1), lambda n: (0, 0)),
                pl.BlockSpec((C, 9 * C), lambda n: (0, 0)),
                pl.BlockSpec((C, 1), lambda n: (0, 0)),
                pl.BlockSpec((9, HW), lambda n: (0, 0)),
            ],
            out_specs=pl.BlockSpec((1, C, HW), lambda n: (n, 0, 0)),
        ),
        compiler_params=pltpu.CompilerParams(
            dimension_semantics=("parallel",)),
    )(x2, w0m, b0c, w1m, b1c, mask)
    return out.reshape(N, C, H, W)


def _reference(x, w0, b0, w1, b1):
    # Pure-JAX reference (same math, NCHW / OIHW) for a correctness check.
    dn = jax.lax.conv_dimension_numbers(x.shape, w0.shape,
                                        ("NCHW", "OIHW", "NCHW"))

    def conv(a, w, b):
        return jax.lax.conv_general_dilated(
            a, w, window_strides=(1, 1), padding="SAME",
            dimension_numbers=dn) + b.reshape(1, -1, 1, 1)

    y0 = conv(jax.nn.relu(x), w0, b0)
    y1 = conv(jax.nn.relu(y0), w1, b1)
    return x + y1


if __name__ == "__main__":
    # Small, deterministic example: batch=2, depth=8, spatial=16x16.
    N, C, H, W = 2, 8, 16, 16
    key = jax.random.PRNGKey(0)
    kx, kw0, kb0, kw1, kb1 = jax.random.split(key, 5)

    # PyTorch Conv2d default init bounds (kaiming_uniform a=sqrt(5) ->
    # uniform(-1/sqrt(fan_in), 1/sqrt(fan_in)) for both weight and bias).
    fan_in = C * 3 * 3
    bound = 1.0 / jnp.sqrt(jnp.float32(fan_in))

    x = jax.random.normal(kx, (N, C, H, W), dtype=jnp.float32)
    w0 = jax.random.uniform(kw0, (C, C, 3, 3), jnp.float32, -bound, bound)
    b0 = jax.random.uniform(kb0, (C,), jnp.float32, -bound, bound)
    w1 = jax.random.uniform(kw1, (C, C, 3, 3), jnp.float32, -bound, bound)
    b1 = jax.random.uniform(kb1, (C,), jnp.float32, -bound, bound)

    out = impala_cnn_residual(x, w0, b0, w1, b1)
    out = jax.block_until_ready(out)

    ref = _reference(x, w0, b0, w1, b1)
    assert out.shape == (N, C, H, W)
    assert jnp.allclose(out, ref, atol=1e-4, rtol=1e-4), "mismatch vs reference"

    print("KERNEL_OK")
</pallas_src>

<mosaic_0001>
module attributes {stable_mosaic.version = 11 : i64} {
  func.func @_impala_residual_kernel(%arg0: i32, %arg1: memref<1x8x256xf32, #tpu.memory_space<vmem>>, %arg2: memref<8x72xf32, #tpu.memory_space<vmem>>, %arg3: memref<8x1xf32, #tpu.memory_space<vmem>>, %arg4: memref<8x72xf32, #tpu.memory_space<vmem>>, %arg5: memref<8x1xf32, #tpu.memory_space<vmem>>, %arg6: memref<9x256xf32, #tpu.memory_space<vmem>>, %arg7: memref<1x8x256xf32, #tpu.memory_space<vmem>>) attributes {dimension_semantics = [#tpu.dimension_semantics<parallel>], iteration_bounds = array<i64: 2>, scalar_prefetch = 0 : i64, scratch_operands = 0 : i64, tpu.core_type = #tpu.core_type<tc>, window_params = [{transform_indices = @transform_0, window_bounds = array<i64: 1, 8, 256>}, {pipeline_mode = #tpu.pipeline_mode<synchronous>, transform_indices = @transform_1, window_bounds = array<i64: 8, 72>}, {pipeline_mode = #tpu.pipeline_mode<synchronous>, transform_indices = @transform_2, window_bounds = array<i64: 8, 1>}, {pipeline_mode = #tpu.pipeline_mode<synchronous>, transform_indices = @transform_3, window_bounds = array<i64: 8, 72>}, {pipeline_mode = #tpu.pipeline_mode<synchronous>, transform_indices = @transform_4, window_bounds = array<i64: 8, 1>}, {pipeline_mode = #tpu.pipeline_mode<synchronous>, transform_indices = @transform_5, window_bounds = array<i64: 9, 256>}, {transform_indices = @transform_6, window_bounds = array<i64: 1, 8, 256>}]} {
    %c0 = arith.constant 0 : index
    %c0_0 = arith.constant 0 : index
    %0 = vector.load %arg6[%c0, %c0_0] : memref<9x256xf32, #tpu.memory_space<vmem>>, vector<1x256xf32>
    %c1 = arith.constant 1 : index
    %c0_1 = arith.constant 0 : index
    %1 = vector.load %arg6[%c1, %c0_1] : memref<9x256xf32, #tpu.memory_space<vmem>>, vector<1x256xf32>
    %c2 = arith.constant 2 : index
    %c0_2 = arith.constant 0 : index
    %2 = vector.load %arg6[%c2, %c0_2] : memref<9x256xf32, #tpu.memory_space<vmem>>, vector<1x256xf32>
    %c3 = arith.constant 3 : index
    %c0_3 = arith.constant 0 : index
    %3 = vector.load %arg6[%c3, %c0_3] : memref<9x256xf32, #tpu.memory_space<vmem>>, vector<1x256xf32>
    %c5 = arith.constant 5 : index
    %c0_4 = arith.constant 0 : index
    %4 = vector.load %arg6[%c5, %c0_4] : memref<9x256xf32, #tpu.memory_space<vmem>>, vector<1x256xf32>
    %c6 = arith.constant 6 : index
    %c0_5 = arith.constant 0 : index
    %5 = vector.load %arg6[%c6, %c0_5] : memref<9x256xf32, #tpu.memory_space<vmem>>, vector<1x256xf32>
    %c7 = arith.constant 7 : index
    %c0_6 = arith.constant 0 : index
    %6 = vector.load %arg6[%c7, %c0_6] : memref<9x256xf32, #tpu.memory_space<vmem>>, vector<1x256xf32>
    %c8 = arith.constant 8 : index
    %c0_7 = arith.constant 0 : index
    %7 = vector.load %arg6[%c8, %c0_7] : memref<9x256xf32, #tpu.memory_space<vmem>>, vector<1x256xf32>
    %c0_8 = arith.constant 0 : index
    %c0_9 = arith.constant 0 : index
    %c0_10 = arith.constant 0 : index
    %8 = vector.load %arg1[%c0_8, %c0_9, %c0_10] : memref<1x8x256xf32, #tpu.memory_space<vmem>>, vector<1x8x256xf32>
    %9 = vector.shape_cast %8 : vector<1x8x256xf32> to vector<8x256xf32>
    %cst = arith.constant 0.000000e+00 : f32
    %10 = vector.broadcast %cst : f32 to vector<8x256xf32>
    %11 = arith.maximumf %9, %10 : vector<8x256xf32>
    %c17_i32 = arith.constant 17 : i32
    %12 = tpu.dynamic_rotate %11 by %c17_i32 dim 1 : vector<8x256xf32>, i32 -> vector<8x256xf32>
    %13 = vector.broadcast %0 : vector<1x256xf32> to vector<8x256xf32>
    %14 = arith.mulf %12, %13 : vector<8x256xf32>
    %c16_i32 = arith.constant 16 : i32
    %15 = tpu.dynamic_rotate %11 by %c16_i32 dim 1 : vector<8x256xf32>, i32 -> vector<8x256xf32>
    %16 = vector.broadcast %1 : vector<1x256xf32> to vector<8x256xf32>
    %17 = arith.mulf %15, %16 : vector<8x256xf32>
    %c15_i32 = arith.constant 15 : i32
    %18 = tpu.dynamic_rotate %11 by %c15_i32 dim 1 : vector<8x256xf32>, i32 -> vector<8x256xf32>
    %19 = vector.broadcast %2 : vector<1x256xf32> to vector<8x256xf32>
    %20 = arith.mulf %18, %19 : vector<8x256xf32>
    %c1_i32 = arith.constant 1 : i32
    %21 = tpu.dynamic_rotate %11 by %c1_i32 dim 1 : vector<8x256xf32>, i32 -> vector<8x256xf32>
    %22 = vector.broadcast %3 : vector<1x256xf32> to vector<8x256xf32>
    %23 = arith.mulf %21, %22 : vector<8x256xf32>
    %c255_i32 = arith.constant 255 : i32
    %24 = tpu.dynamic_rotate %11 by %c255_i32 dim 1 : vector<8x256xf32>, i32 -> vector<8x256xf32>
    %25 = vector.broadcast %4 : vector<1x256xf32> to vector<8x256xf32>
    %26 = arith.mulf %24, %25 : vector<8x256xf32>
    %c241_i32 = arith.constant 241 : i32
    %27 = tpu.dynamic_rotate %11 by %c241_i32 dim 1 : vector<8x256xf32>, i32 -> vector<8x256xf32>
    %28 = vector.broadcast %5 : vector<1x256xf32> to vector<8x256xf32>
    %29 = arith.mulf %27, %28 : vector<8x256xf32>
    %c240_i32 = arith.constant 240 : i32
    %30 = tpu.dynamic_rotate %11 by %c240_i32 dim 1 : vector<8x256xf32>, i32 -> vector<8x256xf32>
    %31 = vector.broadcast %6 : vector<1x256xf32> to vector<8x256xf32>
    %32 = arith.mulf %30, %31 : vector<8x256xf32>
    %c239_i32 = arith.constant 239 : i32
    %33 = tpu.dynamic_rotate %11 by %c239_i32 dim 1 : vector<8x256xf32>, i32 -> vector<8x256xf32>
    %34 = vector.broadcast %7 : vector<1x256xf32> to vector<8x256xf32>
    %35 = arith.mulf %33, %34 : vector<8x256xf32>
    %36 = tpu.concatenate %14, %17, %20, %23, %11, %26, %29, %32, %35 in 0 : vector<8x256xf32>, vector<8x256xf32>, vector<8x256xf32>, vector<8x256xf32>, vector<8x256xf32>, vector<8x256xf32>, vector<8x256xf32>, vector<8x256xf32>, vector<8x256xf32> -> vector<72x256xf32>
    %c0_11 = arith.constant 0 : index
    %c0_12 = arith.constant 0 : index
    %37 = vector.load %arg2[%c0_11, %c0_12] : memref<8x72xf32, #tpu.memory_space<vmem>>, vector<8x72xf32>
    %cst_13 = arith.constant dense<0.000000e+00> : vector<8x256xf32>
    %38 = tpu.matmul %37, %36, %cst_13 {dimension_numbers = #tpu.dot_dimension_numbers<[1], [0], [0], [1], [0, 0, 1, 1], [], []>} : vector<8x72xf32>, vector<72x256xf32>, vector<8x256xf32> -> vector<8x256xf32>
    %c0_14 = arith.constant 0 : index
    %c0_15 = arith.constant 0 : index
    %39 = vector.load %arg3[%c0_14, %c0_15] : memref<8x1xf32, #tpu.memory_space<vmem>>, vector<8x1xf32>
    %40 = vector.broadcast %39 : vector<8x1xf32> to vector<8x256xf32>
    %41 = arith.addf %38, %40 : vector<8x256xf32>
    %cst_16 = arith.constant 0.000000e+00 : f32
    %42 = vector.broadcast %cst_16 : f32 to vector<8x256xf32>
    %43 = arith.maximumf %41, %42 : vector<8x256xf32>
    %c17_i32_17 = arith.constant 17 : i32
    %44 = tpu.dynamic_rotate %43 by %c17_i32_17 dim 1 : vector<8x256xf32>, i32 -> vector<8x256xf32>
    %45 = vector.broadcast %0 : vector<1x256xf32> to vector<8x256xf32>
    %46 = arith.mulf %44, %45 : vector<8x256xf32>
    %c16_i32_18 = arith.constant 16 : i32
    %47 = tpu.dynamic_rotate %43 by %c16_i32_18 dim 1 : vector<8x256xf32>, i32 -> vector<8x256xf32>
    %48 = vector.broadcast %1 : vector<1x256xf32> to vector<8x256xf32>
    %49 = arith.mulf %47, %48 : vector<8x256xf32>
    %c15_i32_19 = arith.constant 15 : i32
    %50 = tpu.dynamic_rotate %43 by %c15_i32_19 dim 1 : vector<8x256xf32>, i32 -> vector<8x256xf32>
    %51 = vector.broadcast %2 : vector<1x256xf32> to vector<8x256xf32>
    %52 = arith.mulf %50, %51 : vector<8x256xf32>
    %c1_i32_20 = arith.constant 1 : i32
    %53 = tpu.dynamic_rotate %43 by %c1_i32_20 dim 1 : vector<8x256xf32>, i32 -> vector<8x256xf32>
    %54 = vector.broadcast %3 : vector<1x256xf32> to vector<8x256xf32>
    %55 = arith.mulf %53, %54 : vector<8x256xf32>
    %c255_i32_21 = arith.constant 255 : i32
    %56 = tpu.dynamic_rotate %43 by %c255_i32_21 dim 1 : vector<8x256xf32>, i32 -> vector<8x256xf32>
    %57 = vector.broadcast %4 : vector<1x256xf32> to vector<8x256xf32>
    %58 = arith.mulf %56, %57 : vector<8x256xf32>
    %c241_i32_22 = arith.constant 241 : i32
    %59 = tpu.dynamic_rotate %43 by %c241_i32_22 dim 1 : vector<8x256xf32>, i32 -> vector<8x256xf32>
    %60 = vector.broadcast %5 : vector<1x256xf32> to vector<8x256xf32>
    %61 = arith.mulf %59, %60 : vector<8x256xf32>
    %c240_i32_23 = arith.constant 240 : i32
    %62 = tpu.dynamic_rotate %43 by %c240_i32_23 dim 1 : vector<8x256xf32>, i32 -> vector<8x256xf32>
    %63 = vector.broadcast %6 : vector<1x256xf32> to vector<8x256xf32>
    %64 = arith.mulf %62, %63 : vector<8x256xf32>
    %c239_i32_24 = arith.constant 239 : i32
    %65 = tpu.dynamic_rotate %43 by %c239_i32_24 dim 1 : vector<8x256xf32>, i32 -> vector<8x256xf32>
    %66 = vector.broadcast %7 : vector<1x256xf32> to vector<8x256xf32>
    %67 = arith.mulf %65, %66 : vector<8x256xf32>
    %68 = tpu.concatenate %46, %49, %52, %55, %43, %58, %61, %64, %67 in 0 : vector<8x256xf32>, vector<8x256xf32>, vector<8x256xf32>, vector<8x256xf32>, vector<8x256xf32>, vector<8x256xf32>, vector<8x256xf32>, vector<8x256xf32>, vector<8x256xf32> -> vector<72x256xf32>
    %c0_25 = arith.constant 0 : index
    %c0_26 = arith.constant 0 : index
    %69 = vector.load %arg4[%c0_25, %c0_26] : memref<8x72xf32, #tpu.memory_space<vmem>>, vector<8x72xf32>
    %cst_27 = arith.constant dense<0.000000e+00> : vector<8x256xf32>
    %70 = tpu.matmul %69, %68, %cst_27 {dimension_numbers = #tpu.dot_dimension_numbers<[1], [0], [0], [1], [0, 0, 1, 1], [], []>} : vector<8x72xf32>, vector<72x256xf32>, vector<8x256xf32> -> vector<8x256xf32>
    %c0_28 = arith.constant 0 : index
    %c0_29 = arith.constant 0 : index
    %71 = vector.load %arg5[%c0_28, %c0_29] : memref<8x1xf32, #tpu.memory_space<vmem>>, vector<8x1xf32>
    %72 = vector.broadcast %71 : vector<8x1xf32> to vector<8x256xf32>
    %73 = arith.addf %70, %72 : vector<8x256xf32>
    %c0_30 = arith.constant 0 : index
    %c0_31 = arith.constant 0 : index
    %c0_32 = arith.constant 0 : index
    %74 = vector.load %arg1[%c0_30, %c0_31, %c0_32] : memref<1x8x256xf32, #tpu.memory_space<vmem>>, vector<1x8x256xf32>
    %75 = vector.shape_cast %74 : vector<1x8x256xf32> to vector<8x256xf32>
    %76 = arith.addf %75, %73 : vector<8x256xf32>
    %c0_33 = arith.constant 0 : index
    %c0_34 = arith.constant 0 : index
    %c0_35 = arith.constant 0 : index
    %77 = vector.load %arg7[%c0_33, %c0_34, %c0_35] : memref<1x8x256xf32, #tpu.memory_space<vmem>>, vector<1x8x256xf32>
    %78 = vector.shape_cast %77 : vector<1x8x256xf32> to vector<8x256xf32>
    %79 = vector.shape_cast %76 : vector<8x256xf32> to vector<1x8x256xf32>
    tpu.vector_store %arg7[%c0_33, %c0_34, %c0_35], %79 {strides = array<i32>} : memref<1x8x256xf32, #tpu.memory_space<vmem>>, vector<1x8x256xf32>,
    return
  }
  func.func @transform_0(%arg0: i32) -> (i32, i32, i32) {
    %c0_i32 = arith.constant 0 : i32
    %c0_i32_0 = arith.constant 0 : i32
    %c0_i32_1 = arith.constant 0 : i32
    return %arg0, %c0_i32, %c0_i32_0 : i32, i32, i32
  }
  func.func @transform_1(%arg0: i32) -> (i32, i32) {
    %c0_i32 = arith.constant 0 : i32
    %c0_i32_0 = arith.constant 0 : i32
    %c0_i32_1 = arith.constant 0 : i32
    return %c0_i32, %c0_i32_0 : i32, i32
  }
  func.func @transform_2(%arg0: i32) -> (i32, i32) {
    %c0_i32 = arith.constant 0 : i32
    %c0_i32_0 = arith.constant 0 : i32
    %c0_i32_1 = arith.constant 0 : i32
    return %c0_i32, %c0_i32_0 : i32, i32
  }
  func.func @transform_3(%arg0: i32) -> (i32, i32) {
    %c0_i32 = arith.constant 0 : i32
    %c0_i32_0 = arith.constant 0 : i32
    %c0_i32_1 = arith.constant 0 : i32
    return %c0_i32, %c0_i32_0 : i32, i32
  }
  func.func @transform_4(%arg0: i32) -> (i32, i32) {
    %c0_i32 = arith.constant 0 : i32
    %c0_i32_0 = arith.constant 0 : i32
    %c0_i32_1 = arith.constant 0 : i32
    return %c0_i32, %c0_i32_0 : i32, i32
  }
  func.func @transform_5(%arg0: i32) -> (i32, i32) {
    %c0_i32 = arith.constant 0 : i32
    %c0_i32_0 = arith.constant 0 : i32
    %c0_i32_1 = arith.constant 0 : i32
    return %c0_i32, %c0_i32_0 : i32, i32
  }
  func.func @transform_6(%arg0: i32) -> (i32, i32, i32) {
    %c0_i32 = arith.constant 0 : i32
    %c0_i32_0 = arith.constant 0 : i32
    %c0_i32_1 = arith.constant 0 : i32
    return %arg0, %c0_i32, %c0_i32_0 : i32, i32, i32
  }
}

</mosaic_0001>

<llo_original>
// kernel: tpu_custom_call.1
$region0: #{tpu_custom_call.1}
  #allocation0 [shape = 'u32[]', space=smem, size = 0x4, offset = 0x4, fixed_abs, tag = 'smem constant byte address 0x4 - core index']
  #allocation1 [shape = 'u32[144,128]{1,0:T(1,128)}', space=vmem, size = 0x12000, scoped, tag = 'internal scratch']
  %s0 = inlined_call_operand.hbm [shape: f32[2,8,256], index: 0, kind: input, shape index: {}]
  %s1 = inlined_call_operand.hbm [shape: f32[8,72], index: 1, kind: input, shape index: {}]
  %s2 = inlined_call_operand.vmem [shape: f32[8,1], index: 2, kind: input, shape index: {}]
  %s3 = inlined_call_operand.hbm [shape: f32[8,72], index: 3, kind: input, shape index: {}]
  %s4 = inlined_call_operand.vmem [shape: f32[8,1], index: 4, kind: input, shape index: {}]
  %s5 = inlined_call_operand.vmem [shape: f32[9,256], index: 5, kind: input, shape index: {}]
  %s6 = inlined_call_operand.hbm [shape: f32[2,8,256], index: 6, kind: output, shape index: {}]
  %s7 = sld [smem:[#allocation0]]
  $region69: #{tpu_custom_call.1} parent=0
    _
  %s9 = ssub.s32 1, %s7
  %s10 = scalar_select 0, %s9, %s7
  $region1: #{tpu_custom_call.1} parent=0
    #allocation2 [shape = 'u8[16384]{0}', space=vmem, size = 0x4000, scoped, tag = 'input window, operand 0']
    #allocation3 [shape = 's32[2]{0}', space=sflag, size = 0x8, scoped, tag = 'scoped memory for tpu_custom_call.1']
    #allocation4 [shape = 's32[2]{0}', space=sflag, size = 0x8, scoped, tag = 'scoped memory for tpu_custom_call.1']
    #allocation5 [shape = 'u8[4096]{0}', space=vmem, size = 0x1000, scoped, tag = 'input window, operand 1, single buffered']
    #allocation6 [shape = 's32[1]{0}', space=sflag, size = 0x4, scoped, tag = 'scoped memory for tpu_custom_call.1']
    #allocation7 [shape = 'u8[4096]{0}', space=vmem, size = 0x1000, scoped, tag = 'input window, operand 3, single buffered']
    #allocation8 [shape = 'u8[16384]{0}', space=vmem, size = 0x4000, scoped, tag = 'output window, operand 0']
    %11 = vsyncpa [#allocation3], 0
    %s12 = scalar_lea.sflag [#allocation3], 1
    %13 = vsyncpa %s12, 0
    %14 = vsyncpa [#allocation6], 0
    %15 = vsyncpa [#allocation4], 0
    %s16 = scalar_lea.sflag [#allocation4], 1
    %17 = vsyncpa %s16, 0
    loop: start=0, step=1, limit=4
    $region2: #{tpu_custom_call.1} parent=1 // loop_pre_header
      _
    $region3: #{tpu_custom_call.1} parent=1 // loop_header
      %s19 = sphi 0, %s23
      %p20 = scmp.ge.s32.totalorder %s19, 4
      %s29 = sphi 0, %s31
      %s32 = sphi 0, %s29
      %s33 = sphi 0, %s32
      %s49 = sphi 0, %s33
      %s53 = sphi 0, %s53
      %s55 = sphi 0, %s53
      %s56 = sphi 0, %s55
      %s70 = sphi 0, %s56
      %s74 = sphi 0, %s74
      %s76 = sphi 0, %s74
      %s77 = sphi 0, %s76
      %s91 = sphi 0, %s77
      %s95 = sphi 0, %s95
      %s97 = sphi 0, %s95
      %s98 = sphi 0, %s97
      %s112 = sphi 0, %s98
      %s116 = sphi 0, %s116
      %s118 = sphi 0, %s116
      %s119 = sphi 0, %s118
      %s133 = sphi 0, %s119
      %s137 = sphi 0, %s137
      %s139 = sphi 0, %s137
      %s140 = sphi 0, %s139
      %s154 = sphi 0, %s140
      %s160 = sphi 0, %s162
      %s163 = sphi 0, %s160
      %s164 = sphi 0, %s163
      %s180 = sphi 0, %s164
    $region4: #{tpu_custom_call.1} parent=1 // loop_header_branch
      %22 = sbr.rel (%p20) target = $region8
    $region5: #{tpu_custom_call.1} parent=1 // loop_body
      %s24 = ssub.s32 %s19, 1
      %s25 = ssub.s32 %s19, 2
      %s26 = sadd.s32 %s19, 1
      %s27 = ssub.s32 %s19, %s26
      %p28 = scmp.eq.s32.totalorder %s27, 0
      %s30 = sadd.s32 %s29, 1
      %s31 = scalar_select %p28, %s29, %s30
      %p34 = pneg %p28
      %p35 = scmp.eq.s32.totalorder %s19, 1
      %p36 = por %p34, %p35
      %p37 = scmp.ne.s32.totalorder %s29, %s32
      %p38 = scmp.eq.s32.totalorder %s19, 0
      %p39 = por %p37, %p38
      %p40 = scmp.ne.s32.totalorder %s29, %s32
      %p41 = scmp.eq.s32.totalorder %s24, 1
      %p42 = por %p40, %p41
      %p43 = scmp.ne.s32.totalorder %s32, %s33
      %p44 = scmp.eq.s32.totalorder %s24, 0
      %p45 = por %p43, %p44
      %p46 = scmp.ne.s32.totalorder %s32, %s33
      %p47 = scmp.eq.s32.totalorder %s25, 1
      %p48 = por %p46, %p47
      %p50 = scmp.ne.s32.totalorder %s33, %s49
      %p51 = scmp.eq.s32.totalorder %s25, 0
      %p52 = por %p50, %p51
      %s54 = sadd.s32 %s53, 1
      %p57 = scmp.eq.s32.totalorder %s19, 1
      %p58 = scmp.ne.s32.totalorder %s53, %s55
      %p59 = scmp.eq.s32.totalorder %s19, 0
      %p60 = por %p58, %p59
      %p61 = scmp.ne.s32.totalorder %s53, %s55
      %p62 = scmp.eq.s32.totalorder %s24, 1
      %p63 = por %p61, %p62
      %p64 = scmp.ne.s32.totalorder %s55, %s56
      %p65 = scmp.eq.s32.totalorder %s24, 0
      %p66 = por %p64, %p65
      %p67 = scmp.ne.s32.totalorder %s55, %s56
      %p68 = scmp.eq.s32.totalorder %s25, 1
      %p69 = por %p67, %p68
      %p71 = scmp.ne.s32.totalorder %s56, %s70
      %p72 = scmp.eq.s32.totalorder %s25, 0
      %p73 = por %p71, %p72
      %s75 = sadd.s32 %s74, 1
      %p78 = scmp.eq.s32.totalorder %s19, 1
      %p79 = scmp.ne.s32.totalorder %s74, %s76
      %p80 = scmp.eq.s32.totalorder %s19, 0
      %p81 = por %p79, %p80
      %p82 = scmp.ne.s32.totalorder %s74, %s76
      %p83 = scmp.eq.s32.totalorder %s24, 1
      %p84 = por %p82, %p83
      %p85 = scmp.ne.s32.totalorder %s76, %s77
      %p86 = scmp.eq.s32.totalorder %s24, 0
      %p87 = por %p85, %p86
      %p88 = scmp.ne.s32.totalorder %s76, %s77
      %p89 = scmp.eq.s32.totalorder %s25, 1
      %p90 = por %p88, %p89
      %p92 = scmp.ne.s32.totalorder %s77, %s91
      %p93 = scmp.eq.s32.totalorder %s25, 0
      %p94 = por %p92, %p93
      %s96 = sadd.s32 %s95, 1
      %p99 = scmp.eq.s32.totalorder %s19, 1
      %p100 = scmp.ne.s32.totalorder %s95, %s97
      %p101 = scmp.eq.s32.totalorder %s19, 0
      %p102 = por %p100, %p101
      %p103 = scmp.ne.s32.totalorder %s95, %s97
      %p104 = scmp.eq.s32.totalorder %s24, 1
      %p105 = por %p103, %p104
      %p106 = scmp.ne.s32.totalorder %s97, %s98
      %p107 = scmp.eq.s32.totalorder %s24, 0
      %p108 = por %p106, %p107
      %p109 = scmp.ne.s32.totalorder %s97, %s98
      %p110 = scmp.eq.s32.totalorder %s25, 1
      %p111 = por %p109, %p110
      %p113 = scmp.ne.s32.totalorder %s98, %s112
      %p114 = scmp.eq.s32.totalorder %s25, 0
      %p115 = por %p113, %p114
      %s117 = sadd.s32 %s116, 1
      %p120 = scmp.eq.s32.totalorder %s19, 1
      %p121 = scmp.ne.s32.totalorder %s116, %s118
      %p122 = scmp.eq.s32.totalorder %s19, 0
      %p123 = por %p121, %p122
      %p124 = scmp.ne.s32.totalorder %s116, %s118
      %p125 = scmp.eq.s32.totalorder %s24, 1
      %p126 = por %p124, %p125
      %p127 = scmp.ne.s32.totalorder %s118, %s119
      %p128 = scmp.eq.s32.totalorder %s24, 0
      %p129 = por %p127, %p128
      %p130 = scmp.ne.s32.totalorder %s118, %s119
      %p131 = scmp.eq.s32.totalorder %s25, 1
      %p132 = por %p130, %p131
      %p134 = scmp.ne.s32.totalorder %s119, %s133
      %p135 = scmp.eq.s32.totalorder %s25, 0
      %p136 = por %p134, %p135
      %s138 = sadd.s32 %s137, 1
      %p141 = scmp.eq.s32.totalorder %s19, 1
      %p142 = scmp.ne.s32.totalorder %s137, %s139
      %p143 = scmp.eq.s32.totalorder %s19, 0
      %p144 = por %p142, %p143
      %p145 = scmp.ne.s32.totalorder %s137, %s139
      %p146 = scmp.eq.s32.totalorder %s24, 1
      %p147 = por %p145, %p146
      %p148 = scmp.ne.s32.totalorder %s139, %s140
      %p149 = scmp.eq.s32.totalorder %s24, 0
      %p150 = por %p148, %p149
      %p151 = scmp.ne.s32.totalorder %s139, %s140
      %p152 = scmp.eq.s32.totalorder %s25, 1
      %p153 = por %p151, %p152
      %p155 = scmp.ne.s32.totalorder %s140, %s154
      %p156 = scmp.eq.s32.totalorder %s25, 0
      %p157 = por %p155, %p156
      %s158 = ssub.s32 %s19, %s26
      %p159 = scmp.eq.s32.totalorder %s158, 0
      %s161 = sadd.s32 %s160, 1
      %s162 = scalar_select %p159, %s160, %s161
      %p165 = pneg %p159
      %p166 = scmp.eq.s32.totalorder %s19, 1
      %p167 = por %p165, %p166
      %p168 = scmp.ne.s32.totalorder %s160, %s163
      %p169 = scmp.eq.s32.totalorder %s19, 0
      %p170 = por %p168, %p169
      %p171 = scmp.ne.s32.totalorder %s160, %s163
      %p172 = scmp.eq.s32.totalorder %s24, 1
      %p173 = por %p171, %p172
      %p174 = scmp.ne.s32.totalorder %s163, %s164
      %p175 = scmp.eq.s32.totalorder %s24, 0
      %p176 = por %p174, %p175
      %p177 = scmp.ne.s32.totalorder %s163, %s164
      %p178 = scmp.eq.s32.totalorder %s25, 1
      %p179 = por %p177, %p178
      %p181 = scmp.ne.s32.totalorder %s164, %s180
      %p182 = scmp.eq.s32.totalorder %s25, 0
      %p183 = por %p181, %p182
      %p184 = scmp.le.s32.totalorder 1, %s19
      %p185 = scmp.lt.s32.totalorder %s19, 3
      %p186 = pnand %p184, %p185
      %p187 = pneg %p186
      // Predicated region
      $region9: #{tpu_custom_call.1} parent=5 // pred_check
        _
      $region10: #{tpu_custom_call.1} parent=5 // pred_check_branch
        %189 = sbr.rel (%p186) target = $region12
      $region11: #{tpu_custom_call.1} parent=5 // pred_region
        %s190 = ssub.s32 %s19, 1
        // Predicated region
        $region13: #{tpu_custom_call.1} parent=11 // pred_check
          %p191 = pneg %p66
        $region14: #{tpu_custom_call.1} parent=11 // pred_check_branch
          %193 = sbr.rel (%p191) target = $region16
        $region15: #{tpu_custom_call.1} parent=11 // pred_region
          %s195 = ssub.s32 128, 128
          %196 = vsyncadd [#allocation6], %s195
          %s198 = sshll.u32 [#allocation5], 4
          %s199 = int_to_ptr.vmem [resolvable:$true] %s198
          %201 = dma.hbm_to_vmem [thread:$0]  %s1, 128, %s199, [#allocation6]
        $region16: #{tpu_custom_call.1} parent=11 // pred_fallthru
          _
        // Predicated region
        $region17: #{tpu_custom_call.1} parent=11 // pred_check
          %p202 = pneg %p87
        $region18: #{tpu_custom_call.1} parent=11 // pred_check_branch
          %204 = sbr.rel (%p202) target = $region20
        $region19: #{tpu_custom_call.1} parent=11 // pred_region
          _
        $region20: #{tpu_custom_call.1} parent=11 // pred_fallthru
          _
        // Predicated region
        $region21: #{tpu_custom_call.1} parent=11 // pred_check
          %p205 = pneg %p108
        $region22: #{tpu_custom_call.1} parent=11 // pred_check_branch
          %207 = sbr.rel (%p205) target = $region24
        $region23: #{tpu_custom_call.1} parent=11 // pred_region
          %s209 = ssub.s32 128, 128
          %210 = vsyncadd [#allocation6], %s209
          %s212 = sshll.u32 [#allocation7], 4
          %s213 = int_to_ptr.vmem [resolvable:$true] %s212
          %215 = dma.hbm_to_vmem [thread:$0]  %s3, 128, %s213, [#allocation6]
        $region24: #{tpu_custom_call.1} parent=11 // pred_fallthru
          _
        // Predicated region
        $region25: #{tpu_custom_call.1} parent=11 // pred_check
          %p216 = pneg %p129
        $region26: #{tpu_custom_call.1} parent=11 // pred_check_branch
          %218 = sbr.rel (%p216) target = $region28
        $region27: #{tpu_custom_call.1} parent=11 // pred_region
          _
        $region28: #{tpu_custom_call.1} parent=11 // pred_fallthru
          _
        // Predicated region
        $region29: #{tpu_custom_call.1} parent=11 // pred_check
          %p219 = pneg %p150
        $region30: #{tpu_custom_call.1} parent=11 // pred_check_branch
          %221 = sbr.rel (%p219) target = $region32
        $region31: #{tpu_custom_call.1} parent=11 // pred_region
          _
        $region32: #{tpu_custom_call.1} parent=11 // pred_fallthru
          _
      $region12: #{tpu_custom_call.1} parent=5 // pred_fallthru
        _
      %p222 = scmp.lt.s32.totalorder %s19, 2
      // Predicated region
      $region33: #{tpu_custom_call.1} parent=5 // pred_check
        %p223 = pneg %p222
      $region34: #{tpu_custom_call.1} parent=5 // pred_check_branch
        %225 = sbr.rel (%p223) target = $region36
      $region35: #{tpu_custom_call.1} parent=5 // pred_region
        // Predicated region
        $region37: #{tpu_custom_call.1} parent=35 // pred_check
          %p226 = pneg %p39
        $region38: #{tpu_custom_call.1} parent=35 // pred_check_branch
          %228 = sbr.rel (%p226) target = $region40
        $region39: #{tpu_custom_call.1} parent=35 // pred_region
          %s229 = sand.u32 %s29, 1
          %s230 = scalar_lea.sflag [#allocation3], %s229
          %s231 = sand.u32 %s29, 1
          %s232 = smul.addr %s231, 16
          %s233 = scalar_lea.vmem [#allocation2], %s232
          %s235 = ssub.s32 256, 256
          %236 = vsyncadd %s230, %s235
          %s237 = smul.addr %s19, 2
          %s238 = smul.addr %s237, 128
          %s239 = scalar_lea.hbm %s0, %s238
          %s241 = sshll.u32 %s233, 4
          %s242 = int_to_ptr.vmem [resolvable:$true] %s241
          %244 = dma.hbm_to_vmem [thread:$0]  %s239, 256, %s242, %s230
        $region40: #{tpu_custom_call.1} parent=35 // pred_fallthru
          _
      $region36: #{tpu_custom_call.1} parent=5 // pred_fallthru
        _
      %p245 = scmp.le.s32.totalorder 1, %s19
      %p246 = scmp.lt.s32.totalorder %s19, 3
      %p247 = pnand %p245, %p246
      %p248 = pneg %p247
      // Predicated region
      $region41: #{tpu_custom_call.1} parent=5 // pred_check
        _
      $region42: #{tpu_custom_call.1} parent=5 // pred_check_branch
        %250 = sbr.rel (%p247) target = $region44
      $region43: #{tpu_custom_call.1} parent=5 // pred_region
        %s251 = ssub.s32 %s19, 1
        %s252 = sand.u32 %s32, 1
        %s253 = scalar_lea.sflag [#allocation3], %s252
        %s254 = sand.u32 %s32, 1
        %s255 = smul.addr %s254, 16
        %s256 = scalar_lea.vmem [#allocation2], %s255
        // Predicated region
        $region45: #{tpu_custom_call.1} parent=43 // pred_check
          %p257 = pneg %p45
        $region46: #{tpu_custom_call.1} parent=43 // pred_check_branch
          %259 = sbr.rel (%p257) target = $region48
        $region47: #{tpu_custom_call.1} parent=43 // pred_region
          %260 = dma.done %s253, 256
        $region48: #{tpu_custom_call.1} parent=43 // pred_fallthru
          _
        // Predicated region
        $region49: #{tpu_custom_call.1} parent=43 // pred_check
          %p261 = pneg %p66
        $region50: #{tpu_custom_call.1} parent=43 // pred_check_branch
          %263 = sbr.rel (%p261) target = $region52
        $region51: #{tpu_custom_call.1} parent=43 // pred_region
          %264 = dma.done [#allocation6], 128
        $region52: #{tpu_custom_call.1} parent=43 // pred_fallthru
          _
        // Predicated region
        $region53: #{tpu_custom_call.1} parent=43 // pred_check
          %p265 = pneg %p108
        $region54: #{tpu_custom_call.1} parent=43 // pred_check_branch
          %267 = sbr.rel (%p265) target = $region56
        $region55: #{tpu_custom_call.1} parent=43 // pred_region
          %268 = dma.done [#allocation6], 128
        $region56: #{tpu_custom_call.1} parent=43 // pred_fallthru
          _
        %s269 = sand.u32 %s32, 1
        %s270 = scalar_lea.sflag [#allocation3], %s269
        %s271 = sand.u32 %s32, 1
        %s272 = smul.addr %s271, 16
        %s273 = scalar_lea.vmem [#allocation2], %s272
        %p274 = pneg %p45
        %p275 = pneg %p42
        %p276 = pneg %p66
        %p277 = pneg %p63
        %p278 = pneg %p87
        %p279 = pneg %p84
        %p280 = pneg %p108
        %p281 = pneg %p105
        %p282 = pneg %p129
        %p283 = pneg %p126
        %p284 = pneg %p150
        %p285 = pneg %p147
        %p286 = pneg %p176
        %p287 = pneg %p173
        %s288 = sand.u32 %s163, 1
        %s289 = scalar_lea.sflag [#allocation4], %s288
        %s290 = sand.u32 %s163, 1
        %s291 = smul.addr %s290, 16
        %s292 = scalar_lea.vmem [#allocation8], %s291
        %v293 = vld [vmem:[%s5] ss:$8 sm:$0x3]
        %s294 = scalar_lea.vmem %s5, 1
        %v295 = vld [vmem:[%s294] ss:$8 sm:$0x3]
        %s296 = scalar_lea.vmem %s5, 2
        %v297 = vld [vmem:[%s296] ss:$8 sm:$0x3]
        %s298 = scalar_lea.vmem %s5, 3
        %v299 = vld [vmem:[%s298] ss:$8 sm:$0x3]
        %s300 = scalar_lea.vmem %s5, 5
        %v301 = vld [vmem:[%s300] ss:$8 sm:$0x3]
        %s302 = scalar_lea.vmem %s5, 6
        %v303 = vld [vmem:[%s302] ss:$8 sm:$0x3]
        %s304 = scalar_lea.vmem %s5, 7
        %v305 = vld [vmem:[%s304] ss:$8 sm:$0x3]
        %s306 = scalar_lea.vmem %s5, 16
        %v307 = vld [vmem:[%s306] ss:$8 sm:$0x3]
        %v308 = vld [vmem:[%s256] sm:$0xff]
        %v309 = vld [vmem:[%s256 + $0x8] sm:$0xff]
        %v310 = vmax.f32 %v308, 0.0
        %v311 = vmax.f32 %v309, 0.0
        %312 = vrot.lane.b32.xlu0 %v310, 17
        %v313 = vpop.permute.xlu0 %312
        %314 = vrot.lane.b32.xlu0 %v311, 17
        %v315 = vpop.permute.xlu0 %314
        %v316 = vlaneseq
        %v317 = vand.u32 %v316, 127
        %vm318 = vcmp.lt.s32.totalorder %v317, 17
        %v319 = vsel %vm318, %v313, %v315
        %v320 = vsel %vm318, %v315, %v313
        %v322 = vlaneseq
        %v323 = vshrl.u32 %v322, 7
        %v324 = vsub.s32 0, %v323
        %v325 = vrot.slane %v293, %v324
        %v326 = vlaneseq
        %v327 = vshrl.u32 %v326, 7
        %v328 = vsub.s32 1, %v327
        %v329 = vrot.slane %v293, %v328
        %v332 = vmul.f32 %v320, %v325
        %v333 = vmul.f32 %v319, %v329
        %334 = vrot.lane.b32.xlu0 %v310, 16
        %v335 = vpop.permute.xlu0 %334
        %336 = vrot.lane.b32.xlu0 %v311, 16
        %v337 = vpop.permute.xlu0 %336
        %vm338 = vcmp.lt.s32.totalorder %v317, 16
        %v339 = vsel %vm338, %v335, %v337
        %v340 = vsel %vm338, %v337, %v335
        %v342 = vlaneseq
        %v343 = vshrl.u32 %v342, 7
        %v344 = vsub.s32 0, %v343
        %v345 = vrot.slane %v295, %v344
        %v346 = vlaneseq
        %v347 = vshrl.u32 %v346, 7
        %v348 = vsub.s32 1, %v347
        %v349 = vrot.slane %v295, %v348
        %v352 = vmul.f32 %v340, %v345
        %v353 = vmul.f32 %v339, %v349
        %354 = vrot.lane.b32.xlu0 %v310, 15
        %v355 = vpop.permute.xlu0 %354
        %356 = vrot.lane.b32.xlu0 %v311, 15
        %v357 = vpop.permute.xlu0 %356
        %vm358 = vcmp.lt.s32.totalorder %v317, 15
        %v359 = vsel %vm358, %v355, %v357
        %v360 = vsel %vm358, %v357, %v355
        %v362 = vlaneseq
        %v363 = vshrl.u32 %v362, 7
        %v364 = vsub.s32 0, %v363
        %v365 = vrot.slane %v297, %v364
        %v366 = vlaneseq
        %v367 = vshrl.u32 %v366, 7
        %v368 = vsub.s32 1, %v367
        %v369 = vrot.slane %v297, %v368
        %v372 = vmul.f32 %v360, %v365
        %v373 = vmul.f32 %v359, %v369
        %374 = vrot.lane.b32.xlu0 %v310, 1
        %v375 = vpop.permute.xlu0 %374
        %376 = vrot.lane.b32.xlu0 %v311, 1
        %v377 = vpop.permute.xlu0 %376
        %vm378 = vcmp.lt.s32.totalorder %v317, 1
        %v379 = vsel %vm378, %v375, %v377
        %v380 = vsel %vm378, %v377, %v375
        %v382 = vlaneseq
        %v383 = vshrl.u32 %v382, 7
        %v384 = vsub.s32 0, %v383
        %v385 = vrot.slane %v299, %v384
        %v386 = vlaneseq
        %v387 = vshrl.u32 %v386, 7
        %v388 = vsub.s32 1, %v387
        %v389 = vrot.slane %v299, %v388
        %v392 = vmul.f32 %v380, %v385
        %v393 = vmul.f32 %v379, %v389
        %394 = vrot.lane.b32.xlu0 %v310, 127
        %v395 = vpop.permute.xlu0 %394
        %396 = vrot.lane.b32.xlu0 %v311, 127
        %v397 = vpop.permute.xlu0 %396
        %vm398 = vcmp.lt.s32.totalorder %v317, 127
        %v399 = vsel %vm398, %v395, %v397
        %v400 = vsel %vm398, %v397, %v395
        %v402 = vlaneseq
        %v403 = vshrl.u32 %v402, 7
        %v404 = vsub.s32 0, %v403
        %v405 = vrot.slane %v301, %v404
        %v406 = vlaneseq
        %v407 = vshrl.u32 %v406, 7
        %v408 = vsub.s32 1, %v407
        %v409 = vrot.slane %v301, %v408
        %v412 = vmul.f32 %v399, %v405
        %v413 = vmul.f32 %v400, %v409
        %414 = vrot.lane.b32.xlu0 %v310, 113
        %v415 = vpop.permute.xlu0 %414
        %416 = vrot.lane.b32.xlu0 %v311, 113
        %v417 = vpop.permute.xlu0 %416
        %vm418 = vcmp.lt.s32.totalorder %v317, 113
        %v419 = vsel %vm418, %v415, %v417
        %v420 = vsel %vm418, %v417, %v415
        %v422 = vlaneseq
        %v423 = vshrl.u32 %v422, 7
        %v424 = vsub.s32 0, %v423
        %v425 = vrot.slane %v303, %v424
        %v426 = vlaneseq
        %v427 = vshrl.u32 %v426, 7
        %v428 = vsub.s32 1, %v427
        %v429 = vrot.slane %v303, %v428
        %v432 = vmul.f32 %v419, %v425
        %v433 = vmul.f32 %v420, %v429
        %434 = vrot.lane.b32.xlu0 %v310, 112
        %v435 = vpop.permute.xlu0 %434
        %436 = vrot.lane.b32.xlu0 %v311, 112
        %v437 = vpop.permute.xlu0 %436
        %vm438 = vcmp.lt.s32.totalorder %v317, 112
        %v439 = vsel %vm438, %v435, %v437
        %v440 = vsel %vm438, %v437, %v435
        %v442 = vlaneseq
        %v443 = vshrl.u32 %v442, 7
        %v444 = vsub.s32 0, %v443
        %v445 = vrot.slane %v305, %v444
        %v446 = vlaneseq
        %v447 = vshrl.u32 %v446, 7
        %v448 = vsub.s32 1, %v447
        %v449 = vrot.slane %v305, %v448
        %v452 = vmul.f32 %v439, %v445
        %v453 = vmul.f32 %v440, %v449
        %454 = vrot.lane.b32.xlu0 %v310, 111
        %v455 = vpop.permute.xlu0 %454
        %456 = vrot.lane.b32.xlu0 %v311, 111
        %v457 = vpop.permute.xlu0 %456
        %vm458 = vcmp.lt.s32.totalorder %v317, 111
        %v459 = vsel %vm458, %v455, %v457
        %v460 = vsel %vm458, %v457, %v455
        %v462 = vlaneseq
        %v463 = vshrl.u32 %v462, 7
        %v464 = vsub.s32 0, %v463
        %v465 = vrot.slane %v307, %v464
        %v466 = vlaneseq
        %v467 = vshrl.u32 %v466, 7
        %v468 = vsub.s32 1, %v467
        %v469 = vrot.slane %v307, %v468
        %v472 = vmul.f32 %v459, %v465
        %v473 = vmul.f32 %v460, %v469
        %v474 = vld [vmem:[#allocation5] sm:$0xff]
        %v475 = vld [vmem:[%s2] sm:$0xff]
        %477 = vset.pattern.permute.xlu0 0
        %478 = vperm.xlu0 %477, %v475
        %v479 = vpop.permute.xlu0 %478
        %vm481 = vcmask 588800
        %v483 = vsel %vm481, %v474, 0
        %485 = vmatprep.subr.mxu0 %v333
        %486 = vmatpush1.msra.mxu0 %v332
        %487 = vmatprep.subr.mxu0 %v353
        %488 = vmatpush1.msra.mxu0 %v352
        %489 = vmatprep.subr.mxu0 %v373
        %490 = vmatpush1.msra.mxu0 %v372
        %491 = vmatprep.subr.mxu0 %v393
        %492 = vmatpush1.msra.mxu0 %v392
        %493 = vmatprep.subr.mxu0 %v311
        %494 = vmatpush1.msra.mxu0 %v310
        %495 = vmatprep.subr.mxu0 %v413
        %496 = vmatpush1.msra.mxu0 %v412
        %497 = vmatprep.subr.mxu0 %v433
        %498 = vmatpush1.msra.mxu0 %v432
        %499 = vmatprep.subr.mxu0 %v453
        %500 = vmatpush1.msra.mxu0 %v452
        %501 = vmatprep.subr.mxu0 %v473
        %502 = vmatpush1.msra.mxu0 %v472
        %503 = vmatprep.subr.mxu0 0.0
        %504 = vmatpush1.msra.mxu0 0.0
        %505 = vmatprep.subr.mxu0 0.0
        %506 = vmatpush1.msra.mxu0 0.0
        %507 = vmatprep.subr.mxu0 0.0
        %508 = vmatpush1.msra.mxu0 0.0
        %509 = vmatprep.subr.mxu0 0.0
        %510 = vmatpush1.msra.mxu0 0.0
        %511 = vmatprep.subr.mxu0 0.0
        %512 = vmatpush1.msra.mxu0 0.0
        %513 = vmatprep.subr.mxu0 0.0
        %514 = vmatpush1.msra.mxu0 0.0
        %515 = vmatprep.subr.mxu0 0.0
        %516 = vmatpush1.msra.mxu0 0.0
        %517 = vmatprep.subr.mxu0 0.0
        %518 = vmatpush1.msra.mxu0 0.0
        %519 = vmatprep.subr.mxu0 0.0
        %520 = vmatpush1.msra.mxu0 0.0
        %521 = vmatprep.subr.mxu0 0.0
        %522 = vmatpush1.msra.mxu0 0.0
        %523 = vmatprep.subr.mxu0 0.0
        %524 = vmatpush1.msra.mxu0 0.0
        %525 = vmatprep.subr.mxu0 0.0
        %526 = vmatpush1.msra.mxu0 0.0
        %527 = vmatprep.subr.mxu0 0.0
        %528 = vmatpush1.msra.mxu0 0.0
        %529 = vmatprep.subr.mxu0 0.0
        %530 = vmatpush1.msra.mxu0 0.0
        %531 = vmatprep.subr.mxu0 0.0
        %532 = vmatpush1.msra.mxu0 0.0
        %533 = vmatprep.subr.mxu0 0.0
        %534 = vmatpush1.msra.mxu0 0.0
        %535 = vmatprep.subr.mxu0 0.0
        %536 = vmatpush1.msra.mxu0 0.0
        %537 = vmatprep.subr.mxu0 0.0
        %538 = vmatpush1.msra.mxu0 0.0
        %539 = vmatprep.subr.mxu0 0.0
        %540 = vmatpush1.msra.mxu0 0.0
        %541 = vmatprep.subr.mxu0 0.0
        %542 = vmatpush1.msra.mxu0 0.0
        %543 = vmatprep.subr.mxu0 0.0
        %544 = vmatpush1.msra.mxu0 0.0
        %545 = vmatprep.subr.mxu0 0.0
        %546 = vmatpush1.msra.mxu0 0.0
        %547 = vmatprep.subr.mxu0 0.0
        %548 = vmatpush1.msra.mxu0 0.0
        %549 = vmatprep.mubr.f32.mxu0 0.0
        %550 = vmatmul.mubr.f32.gmra.mrb[0].mxu0 %v483
        %v551 = vpop.f32.mrb[0].mxu0
        %v552 = vadd.f32 %v479, %v551
        %v553 = vpop.f32.mrb[0].mxu0
        %v554 = vadd.f32 %v479, %v553
        %555 = vdwg.mxu0
        %v556 = vmax.f32 %v552, 0.0
        %v557 = vmax.f32 %v554, 0.0
        %558 = vrot.lane.b32.xlu0 %v556, 17
        %v559 = vpop.permute.xlu0 %558
        %560 = vrot.lane.b32.xlu0 %v557, 17
        %v561 = vpop.permute.xlu0 %560
        %v562 = vsel %vm318, %v559, %v561
        %v563 = vsel %vm318, %v561, %v559
        %v564 = vmul.f32 %v563, %v325
        %v565 = vmul.f32 %v562, %v329
        %566 = vrot.lane.b32.xlu0 %v556, 16
        %v567 = vpop.permute.xlu0 %566
        %568 = vrot.lane.b32.xlu0 %v557, 16
        %v569 = vpop.permute.xlu0 %568
        %v570 = vsel %vm338, %v567, %v569
        %v571 = vsel %vm338, %v569, %v567
        %v572 = vmul.f32 %v571, %v345
        %v573 = vmul.f32 %v570, %v349
        %574 = vrot.lane.b32.xlu0 %v556, 15
        %v575 = vpop.permute.xlu0 %574
        %576 = vrot.lane.b32.xlu0 %v557, 15
        %v577 = vpop.permute.xlu0 %576
        %v578 = vsel %vm358, %v575, %v577
        %v579 = vsel %vm358, %v577, %v575
        %v580 = vmul.f32 %v579, %v365
        %v581 = vmul.f32 %v578, %v369
        %582 = vrot.lane.b32.xlu0 %v556, 1
        %v583 = vpop.permute.xlu0 %582
        %584 = vrot.lane.b32.xlu0 %v557, 1
        %v585 = vpop.permute.xlu0 %584
        %v586 = vsel %vm378, %v583, %v585
        %v587 = vsel %vm378, %v585, %v583
        %v588 = vmul.f32 %v587, %v385
        %v589 = vmul.f32 %v586, %v389
        %590 = vrot.lane.b32.xlu0 %v556, 127
        %v591 = vpop.permute.xlu0 %590
        %592 = vrot.lane.b32.xlu0 %v557, 127
        %v593 = vpop.permute.xlu0 %592
        %v594 = vsel %vm398, %v591, %v593
        %v595 = vsel %vm398, %v593, %v591
        %v596 = vmul.f32 %v594, %v405
        %v597 = vmul.f32 %v595, %v409
        %598 = vrot.lane.b32.xlu0 %v556, 113
        %v599 = vpop.permute.xlu0 %598
        %600 = vrot.lane.b32.xlu0 %v557, 113
        %v601 = vpop.permute.xlu0 %600
        %v602 = vsel %vm418, %v599, %v601
        %v603 = vsel %vm418, %v601, %v599
        %v604 = vmul.f32 %v602, %v425
        %v605 = vmul.f32 %v603, %v429
        %606 = vrot.lane.b32.xlu0 %v556, 112
        %v607 = vpop.permute.xlu0 %606
        %608 = vrot.lane.b32.xlu0 %v557, 112
        %v609 = vpop.permute.xlu0 %608
        %v610 = vsel %vm438, %v607, %v609
        %v611 = vsel %vm438, %v609, %v607
        %v612 = vmul.f32 %v610, %v445
        %v613 = vmul.f32 %v611, %v449
        %614 = vrot.lane.b32.xlu0 %v556, 111
        %v615 = vpop.permute.xlu0 %614
        %616 = vrot.lane.b32.xlu0 %v557, 111
        %v617 = vpop.permute.xlu0 %616
        %v618 = vsel %vm458, %v615, %v617
        %v619 = vsel %vm458, %v617, %v615
        %v620 = vmul.f32 %v618, %v465
        %v621 = vmul.f32 %v619, %v469
        %v622 = vld [vmem:[#allocation7] sm:$0xff]
        %v623 = vld [vmem:[%s4] sm:$0xff]
        %625 = vset.pattern.permute.xlu0 0
        %626 = vperm.xlu0 %625, %v623
        %v627 = vpop.permute.xlu0 %626
        %v630 = vsel %vm481, %v622, 0
        %632 = vmatprep.subr.mxu0 %v565
        %633 = vmatpush1.msra.mxu0 %v564
        %634 = vmatprep.subr.mxu0 %v573
        %635 = vmatpush1.msra.mxu0 %v572
        %636 = vmatprep.subr.mxu0 %v581
        %637 = vmatpush1.msra.mxu0 %v580
        %638 = vmatprep.subr.mxu0 %v589
        %639 = vmatpush1.msra.mxu0 %v588
        %640 = vmatprep.subr.mxu0 %v557
        %641 = vmatpush1.msra.mxu0 %v556
        %642 = vmatprep.subr.mxu0 %v597
        %643 = vmatpush1.msra.mxu0 %v596
        %644 = vmatprep.subr.mxu0 %v605
        %645 = vmatpush1.msra.mxu0 %v604
        %646 = vmatprep.subr.mxu0 %v613
        %647 = vmatpush1.msra.mxu0 %v612
        %648 = vmatprep.subr.mxu0 %v621
        %649 = vmatpush1.msra.mxu0 %v620
        %650 = vmatprep.subr.mxu0 0.0
        %651 = vmatpush1.msra.mxu0 0.0
        %652 = vmatprep.subr.mxu0 0.0
        %653 = vmatpush1.msra.mxu0 0.0
        %654 = vmatprep.subr.mxu0 0.0
        %655 = vmatpush1.msra.mxu0 0.0
        %656 = vmatprep.subr.mxu0 0.0
        %657 = vmatpush1.msra.mxu0 0.0
        %658 = vmatprep.subr.mxu0 0.0
        %659 = vmatpush1.msra.mxu0 0.0
        %660 = vmatprep.subr.mxu0 0.0
        %661 = vmatpush1.msra.mxu0 0.0
        %662 = vmatprep.subr.mxu0 0.0
        %663 = vmatpush1.msra.mxu0 0.0
        %664 = vmatprep.subr.mxu0 0.0
        %665 = vmatpush1.msra.mxu0 0.0
        %666 = vmatprep.subr.mxu0 0.0
        %667 = vmatpush1.msra.mxu0 0.0
        %668 = vmatprep.subr.mxu0 0.0
        %669 = vmatpush1.msra.mxu0 0.0
        %670 = vmatprep.subr.mxu0 0.0
        %671 = vmatpush1.msra.mxu0 0.0
        %672 = vmatprep.subr.mxu0 0.0
        %673 = vmatpush1.msra.mxu0 0.0
        %674 = vmatprep.subr.mxu0 0.0
        %675 = vmatpush1.msra.mxu0 0.0
        %676 = vmatprep.subr.mxu0 0.0
        %677 = vmatpush1.msra.mxu0 0.0
        %678 = vmatprep.subr.mxu0 0.0
        %679 = vmatpush1.msra.mxu0 0.0
        %680 = vmatprep.subr.mxu0 0.0
        %681 = vmatpush1.msra.mxu0 0.0
        %682 = vmatprep.subr.mxu0 0.0
        %683 = vmatpush1.msra.mxu0 0.0
        %684 = vmatprep.subr.mxu0 0.0
        %685 = vmatpush1.msra.mxu0 0.0
        %686 = vmatprep.subr.mxu0 0.0
        %687 = vmatpush1.msra.mxu0 0.0
        %688 = vmatprep.subr.mxu0 0.0
        %689 = vmatpush1.msra.mxu0 0.0
        %690 = vmatprep.subr.mxu0 0.0
        %691 = vmatpush1.msra.mxu0 0.0
        %692 = vmatprep.subr.mxu0 0.0
        %693 = vmatpush1.msra.mxu0 0.0
        %694 = vmatprep.subr.mxu0 0.0
        %695 = vmatpush1.msra.mxu0 0.0
        %696 = vmatprep.mubr.f32.mxu0 0.0
        %697 = vmatmul.mubr.f32.gmra.mrb[0].mxu0 %v630
        %v698 = vpop.f32.mrb[0].mxu0
        %v699 = vadd.f32 %v627, %v698
        %v700 = vpop.f32.mrb[0].mxu0
        %v701 = vadd.f32 %v627, %v700
        %702 = vdwg.mxu0
        %v703 = vadd.f32 %v308, %v699
        %v704 = vadd.f32 %v309, %v701
        %705 = vst [vmem:[%s292] sm:$0xff] %v703
        %706 = vst [vmem:[%s292 + $0x8] sm:$0xff] %v704
        %s707 = sand.u32 %s163, 1
        %s708 = scalar_lea.sflag [#allocation4], %s707
        %s709 = sand.u32 %s163, 1
        %s710 = smul.addr %s709, 16
        %s711 = scalar_lea.vmem [#allocation8], %s710
        // Predicated region
        $region57: #{tpu_custom_call.1} parent=43 // pred_check
          %p712 = pneg %p173
        $region58: #{tpu_custom_call.1} parent=43 // pred_check_branch
          %714 = sbr.rel (%p712) target = $region60
        $region59: #{tpu_custom_call.1} parent=43 // pred_region
          %s716 = ssub.s32 256, 256
          %717 = vsyncadd %s708, %s716
          %s718 = smul.addr %s24, 2
          %s719 = smul.addr %s718, 128
          %s720 = scalar_lea.hbm %s6, %s719
          %s722 = sshll.u32 %s711, 4
          %s723 = int_to_ptr.vmem [resolvable:$true] %s722
          %725 = dma.vmem_to_hbm [thread:$0]  %s723, 256, %s720, %s708
        $region60: #{tpu_custom_call.1} parent=43 // pred_fallthru
          _
      $region44: #{tpu_custom_call.1} parent=5 // pred_fallthru
        _
      %p726 = scmp.le.s32.totalorder 2, %s19
      // Predicated region
      $region61: #{tpu_custom_call.1} parent=5 // pred_check
        %p727 = pneg %p726
      $region62: #{tpu_custom_call.1} parent=5 // pred_check_branch
        %729 = sbr.rel (%p727) target = $region64
      $region63: #{tpu_custom_call.1} parent=5 // pred_region
        %s730 = ssub.s32 %s19, 2
        // Predicated region
        $region65: #{tpu_custom_call.1} parent=63 // pred_check
          %p731 = pneg %p179
        $region66: #{tpu_custom_call.1} parent=63 // pred_check_branch
          %733 = sbr.rel (%p731) target = $region68
        $region67: #{tpu_custom_call.1} parent=63 // pred_region
          %s734 = sand.u32 %s164, 1
          %s735 = scalar_lea.sflag [#allocation4], %s734
          %s736 = sand.u32 %s164, 1
          %s737 = smul.addr %s736, 16
          %s738 = scalar_lea.vmem [#allocation8], %s737
          %739 = dma.done %s735, 256
        $region68: #{tpu_custom_call.1} parent=63 // pred_fallthru
          _
      $region64: #{tpu_custom_call.1} parent=5 // pred_fallthru
        _
    $region6: #{tpu_custom_call.1} parent=1 // loop_footer
      %s23 = sadd.s32 1, %s19
    $region7: #{tpu_custom_call.1} parent=1 // loop_footer_branch
      %18 = sbr.rel target = $region3
    $region8: #{tpu_custom_call.1} parent=1 // loop_exit
      _
    %740 = vsyncpa [#allocation3], 1
    %s741 = scalar_lea.sflag [#allocation3], 1
    %742 = vsyncpa %s741, 1
    %743 = vsyncpa [#allocation6], 1
    %744 = vsyncpa [#allocation4], 1
    %s745 = scalar_lea.sflag [#allocation4], 1
    %746 = vsyncpa %s745, 1

</llo_original>
